<compile_context>
chip_gen: v5e
topology: v5e:2x2
jax: 0.10.0
libtpu: 0.0.40
codegen_flags: <defaults>
</compile_context>

<pallas_src>
import math
from functools import partial

import jax
import jax.numpy as jnp
from jax import lax
from jax.experimental import pallas as pl
from jax.experimental.pallas import tpu as pltpu


def _round_up(x: int, m: int) -> int:
    return (x + m - 1) // m * m


def _make_pos_embeddings(d_model_half: int, height: int, width: int):
    """Deterministic sin/cos tables identical to the torch __init__."""
    den = jnp.exp(
        -jnp.arange(0, d_model_half, 2, dtype=jnp.float32)
        * math.log(10000.0) / d_model_half)

    def emb(n):
        pos = jnp.arange(n, dtype=jnp.float32)[:, None]      # [n, 1]
        e = jnp.zeros((n, d_model_half), jnp.float32)
        e = e.at[:, 0::2].set(jnp.sin(pos * den))
        e = e.at[:, 1::2].set(jnp.cos(pos * den))
        return e

    pos_h_embedding = emb(height)   # [height, d_model_half]
    pos_w_embedding = emb(width)    # [width,  d_model_half]
    return pos_h_embedding, pos_w_embedding


def _make_fused_table(pos_w, pos_h, group: int, pack: int, dtype):
    """Block-diagonal gather table of shape [pack*group, pack*D].

    For packed token j (0..pack-1):
      rows [j*group,       j*group+width)        hold pos_w in cols [j*D, j*D+dh)
      rows [j*group+width, j*group+width+height) hold pos_h in cols [j*D+dh, (j+1)*D)
    Rows [j*group+width+height, (j+1)*group) are zero ("dead" rows) and absorb
    pad/eos tokens.  One one-hot @ table matmul therefore performs both
    gathers, the x/y concat, validity masking and the pack-token lane packing.
    """
    width, dh = pos_w.shape
    height = pos_h.shape[0]
    D = 2 * dh
    tbl = jnp.zeros((pack * group, pack * D), jnp.float32)
    for j in range(pack):
        r0, c0 = j * group, j * D
        tbl = tbl.at[r0:r0 + width, c0:c0 + dh].set(pos_w)
        tbl = tbl.at[r0 + width:r0 + width + height, c0 + dh:c0 + D].set(pos_h)
    return tbl.astype(dtype)


def _pe_kernel(tok_ref, tbl_ref, out_ref, *,
               pad_idx, eos_idx, n_special, height, width, scale,
               group, piece_w):
    tok = tok_ref[...]                                       # [T, pack] int32
    t, pack = tok.shape

    # ---- index math on the narrow [T, pack] arrays --------------------------
    # torch: y = actions // (width/scale) + scale//2 ; x = actions % (width/scale) + scale//2
    valid = jnp.logical_and(tok != pad_idx, tok != eos_idx)
    actions = (tok - n_special).astype(jnp.float32)
    w_over_s = float(width) / float(scale)
    half = float(scale // 2)
    q = jnp.floor(actions / w_over_s)
    x = actions - q * w_over_s + half                        # floor-mod -> always >= 0
    y = q + half
    xi = x.astype(jnp.int32)                                 # .long() truncation
    yi = y.astype(jnp.int32)
    yi = jnp.where(yi < 0, yi + height, yi)                  # torch table[-1] wrap (<sos>)
    # Fold validity into the gather indices: pad/eos tokens hit the zero
    # "dead" rows [width+height, group) of their block -> exact zero output,
    # no mask op on the wide one-hot array.
    dead = width + height
    xt = jnp.where(valid, xi, dead)                          # local row of x gather
    yt = jnp.where(valid, yi + width, dead)                  # local row of y gather

    # ---- one-hot built in 128-lane-aligned pieces ----------------------------
    # Blocks are lane-disjoint, so pieces combine with a free (lane-aligned)
    # concat; one shared iota; per wide element: 4 cmp + 3 or + 1 cast.
    n_pieces = (pack * group) // piece_w
    bpp = piece_w // group                                   # blocks per piece
    ll = lax.broadcasted_iota(jnp.int32, (t, piece_w), 1)
    pieces = []
    for p in range(n_pieces):
        hit = None
        for b in range(bpp):
            j = p * bpp + b
            off = b * group
            hb = jnp.logical_or(ll == (xt[:, j:j + 1] + off),
                                ll == (yt[:, j:j + 1] + off))
            hit = hb if hit is None else jnp.logical_or(hit, hb)
        pieces.append(hit.astype(tbl_ref.dtype))
    oh = pieces[0] if n_pieces == 1 else jnp.concatenate(pieces, axis=1)

    # One MXU matmul: gather + x/y concat + pad/eos masking + lane packing.
    out_ref[...] = jnp.dot(oh, tbl_ref[...],
                           preferred_element_type=jnp.float32
                           ).astype(out_ref.dtype)


class PositionalEncoding2DPallas:
    def __init__(self, pa, d_model: int, dropout: float = 0.0,
                 height: int = 20, width: int = 32,
                 max_tile_tokens: int = 8192, split_tokens: int = 2048,
                 table_dtype=jnp.float32, out_dtype=jnp.float32):
        d_model_half = d_model // 2
        self.pa = pa
        self.n_special_symbols = len(pa["special_symbols"])
        self.d_model = d_model_half
        self.height = height
        self.width = width
        self.table_dtype = table_dtype      # bf16 = faster MXU, needs owner sign-off
        self.out_dtype = out_dtype          # bf16 = half the HBM write stream

        self.pos_h_embedding, self.pos_w_embedding = _make_pos_embeddings(
            d_model_half, height, width)

        D = 2 * d_model_half
        self.out_dim = D
        # Pack 128//D consecutive tokens per 128-lane output row when D divides
        # 128 (unmasked full-lane stores); otherwise 1 token/row.
        self.pack = (128 // D) if (D < 128 and 128 % D == 0) else 1
        # Smallest power of two STRICTLY larger than width+height so every
        # block has at least one zero "dead" row for pad/eos redirection.
        self.group = 1 << (width + height).bit_length()
        K = self.pack * self.group
        # Build the one-hot in 128-lane-aligned pieces when geometry allows
        # (free concat); otherwise a single full-width piece.
        if K > 128 and K % 128 == 0 and 128 % self.group == 0:
            self.piece_w = 128
        else:
            self.piece_w = K

        self.fused_table = _make_fused_table(
            self.pos_w_embedding, self.pos_h_embedding,
            self.group, self.pack, table_dtype)

        align = 8 * self.pack
        self.align = align
        self.max_tile_tokens = max(_round_up(max_tile_tokens, align), align)
        self.split_tokens = max(split_tokens, align)

    def __call__(self, tgt_seq, scale: int = 1):
        B, L = tgt_seq.shape
        N = B * L
        D = self.out_dim
        pack = self.pack
        lane_w = pack * D
        K = pack * self.group
        pad_idx = int(self.pa["pad_idx"])

        # Token tile: as large as possible (amortizes per-step overhead,
        # deepens DMA bursts), but split in two for "large" single-tile inputs
        # so the ("parallel",) grid feeds both v7x TensorCores.
        align = self.align
        n_aligned = _round_up(N, align)
        if n_aligned > self.max_tile_tokens:
            tile_n = self.max_tile_tokens
        elif n_aligned >= 2 * self.split_tokens:
            tile_n = _round_up((n_aligned + 1) // 2, align)
        else:
            tile_n = n_aligned
        n_pad = _round_up(N, tile_n)
        tile_t = tile_n // pack

        tok = tgt_seq.reshape(-1).astype(jnp.int32)
        if n_pad != N:
            # padded slots use pad_idx -> land on zero dead rows inside kernel
            tok = jnp.concatenate(
                [tok, jnp.full((n_pad - N,), pad_idx, jnp.int32)])
        tok2 = tok.reshape(n_pad // pack, pack)

        kernel = partial(
            _pe_kernel,
            pad_idx=pad_idx,
            eos_idx=int(self.pa["eos_idx"]),
            n_special=self.n_special_symbols,
            height=self.height,
            width=self.width,
            scale=scale,
            group=self.group,
            piece_w=self.piece_w,
        )

        out = pl.pallas_call(
            kernel,
            out_shape=jax.ShapeDtypeStruct((n_pad // pack, lane_w),
                                           self.out_dtype),
            grid_spec=pltpu.PrefetchScalarGridSpec(
                num_scalar_prefetch=0,
                grid=(n_pad // tile_n,),
                in_specs=[
                    # token tile marches along the grid
                    pl.BlockSpec((tile_t, pack), lambda i: (i, 0)),
                    # fused table stays resident in VMEM across all steps
                    pl.BlockSpec((K, lane_w), lambda i: (0, 0)),
                ],
                out_specs=pl.BlockSpec((tile_t, lane_w), lambda i: (i, 0)),
            ),
            compiler_params=pltpu.CompilerParams(
                dimension_semantics=("parallel",),
                vmem_limit_bytes=32 * 1024 * 1024),
        )(tok2, self.fused_table)

        # Free row-major reinterpretation: [n_pad//pack, pack*D] == [n_pad, D]
        pe = out.reshape(n_pad, D)[:N].reshape(B, L, D)
        return pe


def _reference(mod: PositionalEncoding2DPallas, tgt_seq, scale: int = 1):
    """Pure-JAX re-implementation of the torch forward() for checking."""
    pad = int(mod.pa["pad_idx"])
    eos = int(mod.pa["eos_idx"])
    valid = jnp.logical_and(tgt_seq != pad, tgt_seq != eos)
    actions = (tgt_seq - mod.n_special_symbols).astype(jnp.float32)
    w_over_s = mod.width / scale
    half = scale // 2
    q = jnp.floor(actions / w_over_s)
    y = q + half
    x = actions - q * w_over_s + half
    xi = x.astype(jnp.int32)
    yi = y.astype(jnp.int32)
    xi = jnp.where(xi < 0, xi + mod.width, xi)
    yi = jnp.where(yi < 0, yi + mod.height, yi)
    pe_x = mod.pos_w_embedding[xi]
    pe_y = mod.pos_h_embedding[yi]
    pe = jnp.concatenate([pe_x, pe_y], axis=-1)
    return jnp.where(valid[..., None], pe, 0.0)


if __name__ == "__main__":
    # pa: special_symbols = [pad, eos, sos]; pad_idx = 0, eos_idx = 1
    pa = {"special_symbols": ["<pad>", "<eos>", "<sos>"], "pad_idx": 0, "eos_idx": 1}

    d_model = 32          # module halves it -> tables of dim 16, output dim 32
    height, width = 20, 32
    n_tokens = len(pa["special_symbols"]) + height * width

    module = PositionalEncoding2DPallas(pa, d_model, dropout=0.1,
                                        height=height, width=width)

    # --- small exact check (float32 path) -----------------------------------
    B, L = 2, 8
    key = jax.random.PRNGKey(0)
    tgt_seq = jax.random.randint(key, (B, L), 0, n_tokens, dtype=jnp.int32)
    # exercise pad / eos masking and the <sos> negative-index wrap path
    tgt_seq = (tgt_seq.at[0, 0].set(pa["pad_idx"])
                      .at[1, L - 1].set(pa["eos_idx"])
                      .at[0, 1].set(2))

    pe = jax.block_until_ready(module(tgt_seq, scale=1))
    ref = _reference(module, tgt_seq, scale=1)
    assert pe.shape == (B, L, d_model)
    assert jnp.allclose(pe, ref, atol=1e-5, rtol=1e-5), "mismatch vs reference"

    # --- multi-tile grid path (grid > 1, padding, megacore-friendly split) ---
    key2 = jax.random.PRNGKey(1)
    B2, L2 = 4, 3000
    tgt2 = jax.random.randint(key2, (B2, L2), 0, n_tokens, dtype=jnp.int32)
    tgt2 = tgt2.at[0, 0].set(pa["pad_idx"]).at[1, 5].set(pa["eos_idx"]).at[2, 7].set(2)
    pe2 = jax.block_until_ready(module(tgt2, scale=1))
    ref2 = _reference(module, tgt2, scale=1)
    assert pe2.shape == (B2, L2, d_model)
    assert jnp.allclose(pe2, ref2, atol=1e-5, rtol=1e-5), "mismatch (multi-tile)"

    # --- bf16 fast path (table + output in bf16; needs owner sign-off) -------
    module_bf16 = PositionalEncoding2DPallas(
        pa, d_model, dropout=0.1, height=height, width=width,
        table_dtype=jnp.bfloat16, out_dtype=jnp.bfloat16)
    pe3 = jax.block_until_ready(module_bf16(tgt_seq, scale=1))
    assert jnp.allclose(pe3.astype(jnp.float32), ref, atol=1.5e-2, rtol=1.5e-2), \
        "mismatch (bf16 path)"

    print("KERNEL_OK")
</pallas_src>

<mosaic_0001>
module attributes {stable_mosaic.version = 11 : i64} {
  func.func @_pe_kernel(%arg0: i32, %arg1: memref<8x4xi32, #tpu.memory_space<vmem>>, %arg2: memref<256x128xf32, #tpu.memory_space<vmem>>, %arg3: memref<8x128xf32, #tpu.memory_space<vmem>>) attributes {dimension_semantics = [#tpu.dimension_semantics<parallel>], iteration_bounds = array<i64: 1>, scalar_prefetch = 0 : i64, scratch_operands = 0 : i64, tpu.core_type = #tpu.core_type<tc>, window_params = [{transform_indices = @transform_0, window_bounds = array<i64: 8, 4>}, {pipeline_mode = #tpu.pipeline_mode<synchronous>, transform_indices = @transform_1, window_bounds = array<i64: 256, 128>}, {transform_indices = @transform_2, window_bounds = array<i64: 8, 128>}]} {
    %c0 = arith.constant 0 : index
    %c0_0 = arith.constant 0 : index
    %0 = vector.load %arg1[%c0, %c0_0] : memref<8x4xi32, #tpu.memory_space<vmem>>, vector<8x4xi32>
    %c0_i32 = arith.constant 0 : i32
    %1 = vector.broadcast %c0_i32 : i32 to vector<8x4xi32>
    %2 = arith.cmpi ne, %0, %1 : vector<8x4xi32>
    %c1_i32 = arith.constant 1 : i32
    %3 = vector.broadcast %c1_i32 : i32 to vector<8x4xi32>
    %4 = arith.cmpi ne, %0, %3 : vector<8x4xi32>
    %5 = arith.andi %2, %4 : vector<8x4xi1>
    %c3_i32 = arith.constant 3 : i32
    %6 = vector.broadcast %c3_i32 : i32 to vector<8x4xi32>
    %7 = arith.subi %0, %6 : vector<8x4xi32>
    %8 = arith.sitofp %7 : vector<8x4xi32> to vector<8x4xf32>
    %cst = arith.constant 3.200000e+01 : f32
    %9 = vector.broadcast %cst : f32 to vector<8x4xf32>
    %10 = arith.divf %8, %9 : vector<8x4xf32>
    %11 = math.floor %10 : vector<8x4xf32>
    %cst_1 = arith.constant 3.200000e+01 : f32
    %12 = vector.broadcast %cst_1 : f32 to vector<8x4xf32>
    %13 = arith.mulf %11, %12 : vector<8x4xf32>
    %14 = arith.subf %8, %13 : vector<8x4xf32>
    %cst_2 = arith.constant 0.000000e+00 : f32
    %15 = vector.broadcast %cst_2 : f32 to vector<8x4xf32>
    %16 = arith.addf %14, %15 : vector<8x4xf32>
    %cst_3 = arith.constant 0.000000e+00 : f32
    %17 = vector.broadcast %cst_3 : f32 to vector<8x4xf32>
    %18 = arith.addf %11, %17 : vector<8x4xf32>
    %19 = arith.fptosi %16 : vector<8x4xf32> to vector<8x4xi32>
    %20 = arith.fptosi %18 : vector<8x4xf32> to vector<8x4xi32>
    %c0_i32_4 = arith.constant 0 : i32
    %21 = vector.broadcast %c0_i32_4 : i32 to vector<8x4xi32>
    %22 = arith.cmpi slt, %20, %21 : vector<8x4xi32>
    %c20_i32 = arith.constant 20 : i32
    %23 = vector.broadcast %c20_i32 : i32 to vector<8x4xi32>
    %24 = arith.addi %20, %23 : vector<8x4xi32>
    %25 = arith.select %22, %24, %20 : vector<8x4xi1>, vector<8x4xi32>
    %c52_i32 = arith.constant 52 : i32
    %26 = vector.broadcast %c52_i32 : i32 to vector<8x4xi32>
    %27 = arith.select %5, %19, %26 : vector<8x4xi1>, vector<8x4xi32>
    %c32_i32 = arith.constant 32 : i32
    %28 = vector.broadcast %c32_i32 : i32 to vector<8x4xi32>
    %29 = arith.addi %25, %28 : vector<8x4xi32>
    %c52_i32_5 = arith.constant 52 : i32
    %30 = vector.broadcast %c52_i32_5 : i32 to vector<8x4xi32>
    %31 = arith.select %5, %29, %30 : vector<8x4xi1>, vector<8x4xi32>
    %32 = tpu.iota {dimensions = array<i32: 1>} : vector<8x128xi32>
    %33 = vector.extract_strided_slice %27 {offsets = [0, 0], sizes = [8, 1], strides = [1, 1]} : vector<8x4xi32> to vector<8x1xi32>
    %c0_i32_6 = arith.constant 0 : i32
    %34 = vector.broadcast %c0_i32_6 : i32 to vector<8x1xi32>
    %35 = arith.addi %33, %34 : vector<8x1xi32>
    %36 = vector.broadcast %35 : vector<8x1xi32> to vector<8x128xi32>
    %37 = arith.cmpi eq, %32, %36 : vector<8x128xi32>
    %38 = vector.extract_strided_slice %31 {offsets = [0, 0], sizes = [8, 1], strides = [1, 1]} : vector<8x4xi32> to vector<8x1xi32>
    %c0_i32_7 = arith.constant 0 : i32
    %39 = vector.broadcast %c0_i32_7 : i32 to vector<8x1xi32>
    %40 = arith.addi %38, %39 : vector<8x1xi32>
    %41 = vector.broadcast %40 : vector<8x1xi32> to vector<8x128xi32>
    %42 = arith.cmpi eq, %32, %41 : vector<8x128xi32>
    %43 = arith.ori %37, %42 : vector<8x128xi1>
    %44 = vector.extract_strided_slice %27 {offsets = [0, 1], sizes = [8, 1], strides = [1, 1]} : vector<8x4xi32> to vector<8x1xi32>
    %c64_i32 = arith.constant 64 : i32
    %45 = vector.broadcast %c64_i32 : i32 to vector<8x1xi32>
    %46 = arith.addi %44, %45 : vector<8x1xi32>
    %47 = vector.broadcast %46 : vector<8x1xi32> to vector<8x128xi32>
    %48 = arith.cmpi eq, %32, %47 : vector<8x128xi32>
    %49 = vector.extract_strided_slice %31 {offsets = [0, 1], sizes = [8, 1], strides = [1, 1]} : vector<8x4xi32> to vector<8x1xi32>
    %c64_i32_8 = arith.constant 64 : i32
    %50 = vector.broadcast %c64_i32_8 : i32 to vector<8x1xi32>
    %51 = arith.addi %49, %50 : vector<8x1xi32>
    %52 = vector.broadcast %51 : vector<8x1xi32> to vector<8x128xi32>
    %53 = arith.cmpi eq, %32, %52 : vector<8x128xi32>
    %54 = arith.ori %48, %53 : vector<8x128xi1>
    %55 = arith.ori %43, %54 : vector<8x128xi1>
    %56 = arith.extui %55 : vector<8x128xi1> to vector<8x128xi32>
    %57 = arith.sitofp %56 : vector<8x128xi32> to vector<8x128xf32>
    %58 = vector.extract_strided_slice %27 {offsets = [0, 2], sizes = [8, 1], strides = [1, 1]} : vector<8x4xi32> to vector<8x1xi32>
    %c0_i32_9 = arith.constant 0 : i32
    %59 = vector.broadcast %c0_i32_9 : i32 to vector<8x1xi32>
    %60 = arith.addi %58, %59 : vector<8x1xi32>
    %61 = vector.broadcast %60 : vector<8x1xi32> to vector<8x128xi32>
    %62 = arith.cmpi eq, %32, %61 : vector<8x128xi32>
    %63 = vector.extract_strided_slice %31 {offsets = [0, 2], sizes = [8, 1], strides = [1, 1]} : vector<8x4xi32> to vector<8x1xi32>
    %c0_i32_10 = arith.constant 0 : i32
    %64 = vector.broadcast %c0_i32_10 : i32 to vector<8x1xi32>
    %65 = arith.addi %63, %64 : vector<8x1xi32>
    %66 = vector.broadcast %65 : vector<8x1xi32> to vector<8x128xi32>
    %67 = arith.cmpi eq, %32, %66 : vector<8x128xi32>
    %68 = arith.ori %62, %67 : vector<8x128xi1>
    %69 = vector.extract_strided_slice %27 {offsets = [0, 3], sizes = [8, 1], strides = [1, 1]} : vector<8x4xi32> to vector<8x1xi32>
    %c64_i32_11 = arith.constant 64 : i32
    %70 = vector.broadcast %c64_i32_11 : i32 to vector<8x1xi32>
    %71 = arith.addi %69, %70 : vector<8x1xi32>
    %72 = vector.broadcast %71 : vector<8x1xi32> to vector<8x128xi32>
    %73 = arith.cmpi eq, %32, %72 : vector<8x128xi32>
    %74 = vector.extract_strided_slice %31 {offsets = [0, 3], sizes = [8, 1], strides = [1, 1]} : vector<8x4xi32> to vector<8x1xi32>
    %c64_i32_12 = arith.constant 64 : i32
    %75 = vector.broadcast %c64_i32_12 : i32 to vector<8x1xi32>
    %76 = arith.addi %74, %75 : vector<8x1xi32>
    %77 = vector.broadcast %76 : vector<8x1xi32> to vector<8x128xi32>
    %78 = arith.cmpi eq, %32, %77 : vector<8x128xi32>
    %79 = arith.ori %73, %78 : vector<8x128xi1>
    %80 = arith.ori %68, %79 : vector<8x128xi1>
    %81 = arith.extui %80 : vector<8x128xi1> to vector<8x128xi32>
    %82 = arith.sitofp %81 : vector<8x128xi32> to vector<8x128xf32>
    %83 = tpu.concatenate %57, %82 in 1 : vector<8x128xf32>, vector<8x128xf32> -> vector<8x256xf32>
    %c0_13 = arith.constant 0 : index
    %c0_14 = arith.constant 0 : index
    %84 = vector.load %arg2[%c0_13, %c0_14] : memref<256x128xf32, #tpu.memory_space<vmem>>, vector<256x128xf32>
    %cst_15 = arith.constant dense<0.000000e+00> : vector<8x128xf32>
    %85 = tpu.matmul %83, %84, %cst_15 {dimension_numbers = #tpu.dot_dimension_numbers<[1], [0], [0], [1], [0, 0, 1, 1], [], []>} : vector<8x256xf32>, vector<256x128xf32>, vector<8x128xf32> -> vector<8x128xf32>
    %c0_16 = arith.constant 0 : index
    %c0_17 = arith.constant 0 : index
    %86 = vector.load %arg3[%c0_16, %c0_17] : memref<8x128xf32, #tpu.memory_space<vmem>>, vector<8x128xf32>
    tpu.vector_store %arg3[%c0_16, %c0_17], %85 {strides = array<i32>} : memref<8x128xf32, #tpu.memory_space<vmem>>, vector<8x128xf32>,
    return
  }
  func.func @transform_0(%arg0: i32) -> (i32, i32) {
    %c0_i32 = arith.constant 0 : i32
    %c0_i32_0 = arith.constant 0 : i32
    return %arg0, %c0_i32 : i32, i32
  }
  func.func @transform_1(%arg0: i32) -> (i32, i32) {
    %c0_i32 = arith.constant 0 : i32
    %c0_i32_0 = arith.constant 0 : i32
    %c0_i32_1 = arith.constant 0 : i32
    return %c0_i32, %c0_i32_0 : i32, i32
  }
  func.func @transform_2(%arg0: i32) -> (i32, i32) {
    %c0_i32 = arith.constant 0 : i32
    %c0_i32_0 = arith.constant 0 : i32
    return %arg0, %c0_i32 : i32, i32
  }
}

</mosaic_0001>

<llo_original>
// kernel: tpu_custom_call.1
$region0: #{tpu_custom_call.1}
  #allocation0 [shape = 'u32[]', space=smem, size = 0x4, offset = 0x4, fixed_abs, tag = 'smem constant byte address 0x4 - core index']
  #allocation1 [shape = 'u32[72,128]{1,0:T(1,128)}', space=vmem, size = 0x9000, scoped, tag = 'internal scratch']
  %s0 = inlined_call_operand.vmem [shape: s32[8,4], index: 0, kind: input, shape index: {}]
  %s1 = inlined_call_operand.hbm [shape: f32[256,128], index: 1, kind: input, shape index: {}]
  %s2 = inlined_call_operand.hbm [shape: f32[8,128], index: 2, kind: output, shape index: {}]
  %s3 = sld [smem:[#allocation0]]
  $region22: #{tpu_custom_call.1} parent=0
    _
  %s5 = ssub.s32 1, %s3
  %s6 = scalar_select 0, %s5, %s3
  $region1: #{tpu_custom_call.1} parent=0
    #allocation2 [shape = 'u8[131072]{0}', space=vmem, size = 0x20000, scoped, tag = 'input window, operand 1, single buffered']
    #allocation3 [shape = 's32[1]{0}', space=sflag, size = 0x4, scoped, tag = 'scoped memory for tpu_custom_call.1']
    #allocation4 [shape = 's32[1]{0}', space=sflag, size = 0x4, scoped, tag = 'scoped memory for tpu_custom_call.1']
    #allocation5 [shape = 'u8[4096]{0}', space=vmem, size = 0x1000, scoped, tag = 'output window, operand 0, single buffered']
    %7 = vsyncpa [#allocation3], 0
    %8 = vsyncpa [#allocation4], 0
    // Predicated region
    $region2: #{tpu_custom_call.1} parent=1 // pred_check
      _
    $region3: #{tpu_custom_call.1} parent=1 // pred_check_branch
      %10 = sbr.rel (0) target = $region5
    $region4: #{tpu_custom_call.1} parent=1 // pred_region
      _
    $region5: #{tpu_custom_call.1} parent=1 // pred_fallthru
      _
    // Predicated region
    $region6: #{tpu_custom_call.1} parent=1 // pred_check
      _
    $region7: #{tpu_custom_call.1} parent=1 // pred_check_branch
      %12 = sbr.rel (0) target = $region9
    $region8: #{tpu_custom_call.1} parent=1 // pred_region
      %14 = vsyncadd [#allocation3], 0
      %s15 = sshll.u32 %s1, 4
      %s16 = int_to_ptr.hbm [resolvable:$true] %s15
      %s17 = sshll.u32 [#allocation2], 4
      %s18 = int_to_ptr.vmem [resolvable:$true] %s17
      %23 = dma.hbm_to_vmem [thread:$0]  %s16, 4096, %s18, [#allocation3], 128, 128, 8
    $region9: #{tpu_custom_call.1} parent=1 // pred_fallthru
      _
    // Predicated region
    $region10: #{tpu_custom_call.1} parent=1 // pred_check
      _
    $region11: #{tpu_custom_call.1} parent=1 // pred_check_branch
      %25 = sbr.rel (0) target = $region13
    $region12: #{tpu_custom_call.1} parent=1 // pred_region
      %27 = dma.done [#allocation3], 4096
    $region13: #{tpu_custom_call.1} parent=1 // pred_fallthru
      _
    %v28 = vld [vmem:[%s0] sm:$0xff]
    %vm29 = vcmp.ne.s32.totalorder %v28, 0
    %vm30 = vcmp.ne.s32.totalorder %v28, 1
    %vm31 = vmand %vm29, %vm30
    %v32 = vsub.s32 %v28, 3
    %v33 = vcvt.s32.f32 %v32
    %v34 = vrcp.pop 32.0
    %v35 = vmul.f32 32.0, %v34
    %v36 = vsub.f32 1.0, %v35
    %v37 = vmul.f32 %v34, %v36
    %v38 = vadd.f32 %v34, %v37
    %vm39 = vweird.f32 %v34
    %v40 = vsel %vm39, %v34, %v38
    %v41 = vmul.f32 %v33, %v40
    %v42 = vfloor.f32 %v41
    %v43 = vmul.f32 %v42, 32.0
    %v44 = vsub.f32 %v33, %v43
    %v45 = vadd.f32 %v44, 0.0
    %v46 = vadd.f32 %v42, 0.0
    %v47 = vcvt.f32.s32.to.zero.pseudo %v45
    %v48 = vcvt.f32.s32.to.zero.pseudo %v46
    %vm49 = vcmp.lt.s32.totalorder %v48, 0
    %v50 = vadd.s32 %v48, 20
    %v51 = vsel %vm49, %v50, %v48
    %v52 = vsel %vm31, %v47, 52
    %v53 = vadd.s32 %v51, 32
    %v54 = vsel %vm31, %v53, 52
    %v55 = vlaneseq
    %v56 = vand.u32 %v55, 127
    %57 = vset.pattern.permute.xlu0 0
    %58 = vperm.xlu0 %57, %v52
    %v59 = vpop.permute.xlu0 %58
    %vm60 = vcmp.eq.s32.totalorder %v56, %v59
    %61 = vset.pattern.permute.xlu0 0
    %62 = vperm.xlu0 %61, %v54
    %v63 = vpop.permute.xlu0 %62
    %vm64 = vcmp.eq.s32.totalorder %v56, %v63
    %vm65 = vmor %vm60, %vm64
    %v66 = vadd.s32 %v52, 64
    %67 = vset.pattern.permute.xlu0 1
    %68 = vperm.xlu0 %67, %v66
    %v69 = vpop.permute.xlu0 %68
    %vm70 = vcmp.eq.s32.totalorder %v56, %v69
    %v71 = vadd.s32 %v54, 64
    %72 = vset.pattern.permute.xlu0 1
    %73 = vperm.xlu0 %72, %v71
    %v74 = vpop.permute.xlu0 %73
    %vm75 = vcmp.eq.s32.totalorder %v56, %v74
    %vm76 = vmor %vm70, %vm75
    %vm77 = vmor %vm65, %vm76
    %v78 = vsel %vm77, 1, 0
    %v79 = vcvt.s32.f32 %v78
    %80 = vset.pattern.permute.xlu0 2
    %81 = vperm.xlu0 %80, %v52
    %v82 = vpop.permute.xlu0 %81
    %vm83 = vcmp.eq.s32.totalorder %v56, %v82
    %84 = vset.pattern.permute.xlu0 2
    %85 = vperm.xlu0 %84, %v54
    %v86 = vpop.permute.xlu0 %85
    %vm87 = vcmp.eq.s32.totalorder %v56, %v86
    %vm88 = vmor %vm83, %vm87
    %89 = vset.pattern.permute.xlu0 3
    %90 = vperm.xlu0 %89, %v66
    %v91 = vpop.permute.xlu0 %90
    %vm92 = vcmp.eq.s32.totalorder %v56, %v91
    %93 = vset.pattern.permute.xlu0 3
    %94 = vperm.xlu0 %93, %v71
    %v95 = vpop.permute.xlu0 %94
    %vm96 = vcmp.eq.s32.totalorder %v56, %v95
    %vm97 = vmor %vm92, %vm96
    %vm98 = vmor %vm88, %vm97
    %v99 = vsel %vm98, 1, 0
    %v100 = vcvt.s32.f32 %v99
    %v101 = vld [vmem:[#allocation2] sm:$0xff]
    %v102 = vld [vmem:[#allocation2 + $0x8] sm:$0xff]
    %v103 = vld [vmem:[#allocation2 + $0x10] sm:$0xff]
    %v104 = vld [vmem:[#allocation2 + $0x18] sm:$0xff]
    %v105 = vld [vmem:[#allocation2 + $0x20] sm:$0xff]
    %v106 = vld [vmem:[#allocation2 + $0x28] sm:$0xff]
    %v107 = vld [vmem:[#allocation2 + $0x30] sm:$0xff]
    %v108 = vld [vmem:[#allocation2 + $0x38] sm:$0xff]
    %v109 = vld [vmem:[#allocation2 + $0x40] sm:$0xff]
    %v110 = vld [vmem:[#allocation2 + $0x48] sm:$0xff]
    %v111 = vld [vmem:[#allocation2 + $0x50] sm:$0xff]
    %v112 = vld [vmem:[#allocation2 + $0x58] sm:$0xff]
    %v113 = vld [vmem:[#allocation2 + $0x60] sm:$0xff]
    %v114 = vld [vmem:[#allocation2 + $0x68] sm:$0xff]
    %v115 = vld [vmem:[#allocation2 + $0x70] sm:$0xff]
    %v116 = vld [vmem:[#allocation2 + $0x78] sm:$0xff]
    %v117 = vld [vmem:[#allocation2 + $0x80] sm:$0xff]
    %v118 = vld [vmem:[#allocation2 + $0x88] sm:$0xff]
    %v119 = vld [vmem:[#allocation2 + $0x90] sm:$0xff]
    %v120 = vld [vmem:[#allocation2 + $0x98] sm:$0xff]
    %v121 = vld [vmem:[#allocation2 + $0xa0] sm:$0xff]
    %v122 = vld [vmem:[#allocation2 + $0xa8] sm:$0xff]
    %v123 = vld [vmem:[#allocation2 + $0xb0] sm:$0xff]
    %v124 = vld [vmem:[#allocation2 + $0xb8] sm:$0xff]
    %v125 = vld [vmem:[#allocation2 + $0xc0] sm:$0xff]
    %v126 = vld [vmem:[#allocation2 + $0xc8] sm:$0xff]
    %v127 = vld [vmem:[#allocation2 + $0xd0] sm:$0xff]
    %v128 = vld [vmem:[#allocation2 + $0xd8] sm:$0xff]
    %v129 = vld [vmem:[#allocation2 + $0xe0] sm:$0xff]
    %v130 = vld [vmem:[#allocation2 + $0xe8] sm:$0xff]
    %v131 = vld [vmem:[#allocation2 + $0xf0] sm:$0xff]
    %v132 = vld [vmem:[#allocation2 + $0xf8] sm:$0xff]
    %133 = vmatpush.msra.mxu0 %v116
    %134 = vmatpush.msra.mxu0 %v115
    %135 = vmatpush.msra.mxu0 %v114
    %136 = vmatpush.msra.mxu0 %v113
    %137 = vmatpush.msra.mxu0 %v112
    %138 = vmatpush.msra.mxu0 %v111
    %139 = vmatpush.msra.mxu0 %v110
    %140 = vmatpush.msra.mxu0 %v109
    %141 = vmatpush.msra.mxu0 %v108
    %142 = vmatpush.msra.mxu0 %v107
    %143 = vmatpush.msra.mxu0 %v106
    %144 = vmatpush.msra.mxu0 %v105
    %145 = vmatpush.msra.mxu0 %v104
    %146 = vmatpush.msra.mxu0 %v103
    %147 = vmatpush.msra.mxu0 %v102
    %148 = vmatpush.msra.mxu0 %v101
    %149 = vmatmul.f32.gmra.mxu0 %v79
    %v150 = vpop.f32.mrf.mxu0
    %v151 = vadd.f32 0.0, %v150
    %152 = vdwg.mxu0
    %153 = vmatpush.msra.mxu0 %v132
    %154 = vmatpush.msra.mxu0 %v131
    %155 = vmatpush.msra.mxu0 %v130
    %156 = vmatpush.msra.mxu0 %v129
    %157 = vmatpush.msra.mxu0 %v128
    %158 = vmatpush.msra.mxu0 %v127
    %159 = vmatpush.msra.mxu0 %v126
    %160 = vmatpush.msra.mxu0 %v125
    %161 = vmatpush.msra.mxu0 %v124
    %162 = vmatpush.msra.mxu0 %v123
    %163 = vmatpush.msra.mxu0 %v122
    %164 = vmatpush.msra.mxu0 %v121
    %165 = vmatpush.msra.mxu0 %v120
    %166 = vmatpush.msra.mxu0 %v119
    %167 = vmatpush.msra.mxu0 %v118
    %168 = vmatpush.msra.mxu0 %v117
    %169 = vmatmul.f32.gmra.mxu0 %v100
    %v170 = vpop.f32.mrf.mxu0
    %v171 = vadd.f32 %v151, %v170
    %172 = vdwg.mxu0
    %173 = vst [vmem:[#allocation5] sm:$0xff] %v171
    // Predicated region
    $region14: #{tpu_custom_call.1} parent=1 // pred_check
      _
    $region15: #{tpu_custom_call.1} parent=1 // pred_check_branch
      %175 = sbr.rel (0) target = $region17
    $region16: #{tpu_custom_call.1} parent=1 // pred_region
      %177 = vsyncadd [#allocation4], 0
      %s179 = sshll.u32 [#allocation5], 4
      %s180 = int_to_ptr.vmem [resolvable:$true] %s179
      %s181 = sshll.u32 %s2, 4
      %s182 = int_to_ptr.hbm [resolvable:$true] %s181
      %184 = dma.vmem_to_hbm [thread:$0]  %s180, 128, %s182, [#allocation4]
    $region17: #{tpu_custom_call.1} parent=1 // pred_fallthru
      _
    // Predicated region
    $region18: #{tpu_custom_call.1} parent=1 // pred_check
      _
    $region19: #{tpu_custom_call.1} parent=1 // pred_check_branch
      %186 = sbr.rel (0) target = $region21
    $region20: #{tpu_custom_call.1} parent=1 // pred_region
      %188 = dma.done [#allocation4], 128
    $region21: #{tpu_custom_call.1} parent=1 // pred_fallthru
      _
    %189 = vsyncpa [#allocation3], 1
    %190 = vsyncpa [#allocation4], 1

</llo_original>
